<compile_context>
chip_gen: v7x
topology: tpu7x:2x2x1
jax: 0.10.0
libtpu: 0.0.40
codegen_flags: <defaults>
</compile_context>

<pallas_src>
import math
import functools

import jax
import jax.numpy as jnp
from jax.experimental import pallas as pl
from jax.experimental.pallas import tpu as pltpu


def _prob_attention_kernel(seed_ref, q_ref, k_ref, v_ref, *rest, scale,
                           dropout_p, has_mask, compute_dtype, H, L_q, L_k):
    if has_mask:
        m_ref, ctx_ref, attn_ref = rest
    else:
        ctx_ref, attn_ref = rest

    b = pl.program_id(0)
    hi = pl.program_id(1)
    qi = pl.program_id(2)

    hb = q_ref.shape[1]
    tq = q_ref.shape[2]

    q = q_ref[0].astype(compute_dtype)        # (hb, tq, D)
    k = k_ref[0].astype(compute_dtype)        # (hb, L_k, D)

    # scores = (Q @ K^T) * scale.  Contraction over D is expressed via
    # dot_general dimension numbers (no materialized transpose of K),
    # batched over the fused head axis; low-precision operands, f32 acc.
    scores = jax.lax.dot_general(
        q, k, dimension_numbers=(((2,), (2,)), ((0,), (0,))),
        preferred_element_type=jnp.float32) * scale          # (hb, tq, L_k)

    if has_mask:
        # Large-negative (not -inf) fill: identical softmax for any row with
        # at least one unmasked entry, but no NaNs for fully-masked rows.
        scores = jnp.where(m_ref[0] == 0, jnp.float32(-1e30), scores)

    s_max = jnp.max(scores, axis=-1, keepdims=True)
    p = jnp.exp(scores - s_max)
    denom = jnp.sum(p, axis=-1, keepdims=True)
    attn = p / denom                                          # f32

    if dropout_p > 0.0:
        # MCDropout (always active).  Counter-based hash PRNG built from pure
        # vector integer ops (portable to Mosaic and interpret mode), with an
        # integer-threshold keep test (no int->float convert / f32 compare).
        shp = attn.shape
        head_io = jax.lax.broadcasted_iota(jnp.int32, shp, 0)
        row_io = jax.lax.broadcasted_iota(jnp.int32, shp, 1)
        col_io = jax.lax.broadcasted_iota(jnp.int32, shp, 2)
        h0 = hi * hb
        q0 = qi * tq
        lin = ((b * H + h0 + head_io) * L_q + (q0 + row_io)) * L_k + col_io
        lin = lin ^ seed_ref[0]
        x = jax.lax.bitcast_convert_type(lin, jnp.uint32)
        # lowbias32 mixer
        x = (x ^ (x >> 16)) * jnp.uint32(0x7FEB352D)
        x = (x ^ (x >> 15)) * jnp.uint32(0x846CA68B)
        x = x ^ (x >> 16)
        r = jax.lax.bitcast_convert_type(x >> 1, jnp.int32)   # 31 uniform bits
        thresh = jnp.int32(int(dropout_p * (1 << 31)))
        keep = r >= thresh
        attn = jnp.where(keep, attn * (1.0 / (1.0 - dropout_p)),
                         jnp.float32(0.0))

    # context = attn @ V  (batched over heads, low-precision operands, f32 acc)
    ctx = jax.lax.dot_general(
        attn.astype(compute_dtype), v_ref[0].astype(compute_dtype),
        dimension_numbers=(((2,), (1,)), ((0,), (0,))),
        preferred_element_type=jnp.float32)                   # (hb, tq, D)

    ctx_ref[0] = ctx.astype(ctx_ref.dtype)
    attn_ref[0] = attn.astype(attn_ref.dtype)


def _choose_tiles(H, L_q, L_k, D, has_mask):
    """Pick the q-row tile (tq) and heads-per-block (hb) so the per-step VMEM
    working set stays bounded on every TPU generation."""
    if L_q <= 512:
        tq = L_q
    else:
        tq = L_q
        for cand in (512, 256, 128):
            if L_q % cand == 0:
                tq = cand
                break

    def block_bytes(hb):
        nbytes = 0
        nbytes += hb * tq * D * 4           # q block
        nbytes += 2 * hb * L_k * D * 4      # k, v blocks (resident across q)
        nbytes += hb * tq * L_k * 4         # attn output block
        nbytes += hb * tq * D * 4           # ctx output block
        if has_mask:
            nbytes += hb * tq * L_k         # int8 mask block
        return nbytes

    budget = 12 * 1024 * 1024               # per buffer set (Pallas double-buffers)
    hb = 1
    for cand in range(H, 0, -1):
        if H % cand == 0 and block_bytes(cand) <= budget:
            hb = cand
            break
    return tq, hb, block_bytes(hb)


def prob_attention(queries, keys, values, attn_mask=None, scale=None,
                   dropout_p=0.1, seed=0, compute_dtype=jnp.bfloat16,
                   attn_dtype=jnp.float32):
    """Pallas implementation of ProbAttention.forward.

    queries: (B, H, L_q, D); keys/values: (B, H, L_k, D);
    attn_mask: broadcastable to (B, H, L_q, L_k) or None.
    Returns (context (B,H,L_q,D), attn (B,H,L_q,L_k)).
    """
    B, H, L_q, D = queries.shape
    L_k = keys.shape[2]
    if scale is None:
        scale = 1.0 / math.sqrt(D)

    has_mask = attn_mask is not None
    tq, hb, block_bytes = _choose_tiles(H, L_q, L_k, D, has_mask)
    grid = (B, H // hb, L_q // tq)

    kernel = functools.partial(
        _prob_attention_kernel, scale=float(scale), dropout_p=float(dropout_p),
        has_mask=has_mask, compute_dtype=compute_dtype, H=H, L_q=L_q, L_k=L_k)

    in_specs = [
        pl.BlockSpec((1, hb, tq, D), lambda b, hi, qi, s: (b, hi, qi, 0)),
        pl.BlockSpec((1, hb, L_k, D), lambda b, hi, qi, s: (b, hi, 0, 0)),
        pl.BlockSpec((1, hb, L_k, D), lambda b, hi, qi, s: (b, hi, 0, 0)),
    ]
    inputs = [queries, keys, values]
    if has_mask:
        mask = jnp.broadcast_to(attn_mask, (B, H, L_q, L_k)).astype(jnp.int8)
        in_specs.append(
            pl.BlockSpec((1, hb, tq, L_k), lambda b, hi, qi, s: (b, hi, qi, 0)))
        inputs.append(mask)

    out_specs = [
        pl.BlockSpec((1, hb, tq, D), lambda b, hi, qi, s: (b, hi, qi, 0)),
        pl.BlockSpec((1, hb, tq, L_k), lambda b, hi, qi, s: (b, hi, qi, 0)),
    ]
    out_shapes = (
        jax.ShapeDtypeStruct((B, H, L_q, D), queries.dtype),
        jax.ShapeDtypeStruct((B, H, L_q, L_k), attn_dtype),
    )

    grid_spec = pltpu.PrefetchScalarGridSpec(
        num_scalar_prefetch=1, grid=grid,
        in_specs=in_specs, out_specs=out_specs)

    # Keep tiles generous (amortize per-step overhead) but safely under the
    # smallest physical VMEM (v7x: 64 MiB); raise the scoped default as needed.
    vmem_limit = int(min(64 * 2**20, max(32 * 2**20, 3 * block_bytes)))

    seed_arr = jnp.array([int(seed) & 0x7FFFFFFF], dtype=jnp.int32)

    context, attn = pl.pallas_call(
        kernel,
        grid_spec=grid_spec,
        out_shape=out_shapes,
        compiler_params=pltpu.CompilerParams(
            dimension_semantics=("parallel", "parallel", "parallel"),
            vmem_limit_bytes=vmem_limit),
    )(seed_arr, *inputs)

    return context, attn


def _reference(q, k, v, mask, scale):
    scores = jnp.einsum("bhqd,bhkd->bhqk", q, k) * scale
    if mask is not None:
        scores = jnp.where(mask == 0, -jnp.inf, scores)
    attn = jax.nn.softmax(scores, axis=-1)
    ctx = jnp.einsum("bhqk,bhkd->bhqd", attn, v)
    return ctx, attn


if __name__ == "__main__":
    B, H, L_q, L_k, D = 2, 4, 8, 8, 32
    key = jax.random.PRNGKey(0)
    kq, kk, kv = jax.random.split(key, 3)
    queries = jax.random.normal(kq, (B, H, L_q, D), dtype=jnp.float32)
    keys = jax.random.normal(kk, (B, H, L_k, D), dtype=jnp.float32)
    values = jax.random.normal(kv, (B, H, L_k, D), dtype=jnp.float32)
    scale = 1.0 / math.sqrt(D)

    # 1) f32 compute, no dropout, no mask: must match a pure-JAX reference.
    ctx0, attn0 = prob_attention(queries, keys, values, attn_mask=None,
                                 dropout_p=0.0, compute_dtype=jnp.float32)
    ctx_ref, attn_ref = _reference(queries, keys, values, None, scale)
    assert jnp.allclose(ctx0, ctx_ref, atol=1e-3), "f32 context mismatch"
    assert jnp.allclose(attn0, attn_ref, atol=1e-3), "f32 attn mismatch"

    # 2) masked path (causal mask), f32 compute, no dropout.
    causal = jnp.tril(jnp.ones((L_q, L_k), jnp.int32))[None, None]
    ctx1, attn1 = prob_attention(queries, keys, values, attn_mask=causal,
                                 dropout_p=0.0, compute_dtype=jnp.float32)
    ctx_ref1, attn_ref1 = _reference(queries, keys, values, causal, scale)
    assert jnp.allclose(ctx1, ctx_ref1, atol=1e-3), "masked context mismatch"
    assert jnp.allclose(attn1, attn_ref1, atol=1e-3), "masked attn mismatch"

    # 3) default fast path: bf16 MXU operands / f32 accumulate, no dropout.
    ctx2, attn2 = prob_attention(queries, keys, values, attn_mask=None,
                                 dropout_p=0.0)
    assert jnp.allclose(ctx2, ctx_ref, atol=3e-2), "bf16 context mismatch"
    assert jnp.allclose(attn2, attn_ref, atol=3e-2), "bf16 attn mismatch"

    # 4) full module semantics: MC dropout always on (p=0.1).
    context, attn = prob_attention(queries, keys, values, attn_mask=None,
                                   dropout_p=0.1, seed=42)
    jax.block_until_ready((context, attn))
    zero_frac = float(jnp.mean((attn == 0.0).astype(jnp.float32)))
    assert 0.01 <= zero_frac <= 0.30, f"dropout rate off: {zero_frac}"
    assert bool(jnp.all(jnp.isfinite(context))), "non-finite context"

    print("KERNEL_OK")
</pallas_src>

<mosaic_0001>
module attributes {stable_mosaic.version = 11 : i64} {
  func.func @_prob_attention_kernel(%arg0: i32, %arg1: i32, %arg2: i32, %arg3: memref<1xi32, #tpu.memory_space<smem>>, %arg4: memref<1x4x8x32xf32, #tpu.memory_space<vmem>>, %arg5: memref<1x4x8x32xf32, #tpu.memory_space<vmem>>, %arg6: memref<1x4x8x32xf32, #tpu.memory_space<vmem>>, %arg7: memref<1x4x8x32xf32, #tpu.memory_space<vmem>>, %arg8: memref<1x4x8x8xf32, #tpu.memory_space<vmem>>) attributes {dimension_semantics = [#tpu.dimension_semantics<parallel>, #tpu.dimension_semantics<parallel>, #tpu.dimension_semantics<parallel>], iteration_bounds = array<i64: 2, 1, 1>, scalar_prefetch = 1 : i64, scratch_operands = 0 : i64, tpu.core_type = #tpu.core_type<tc>, window_params = [{transform_indices = @transform_0, window_bounds = array<i64: 1, 4, 8, 32>}, {transform_indices = @transform_1, window_bounds = array<i64: 1, 4, 8, 32>}, {transform_indices = @transform_2, window_bounds = array<i64: 1, 4, 8, 32>}, {transform_indices = @transform_3, window_bounds = array<i64: 1, 4, 8, 32>}, {transform_indices = @transform_4, window_bounds = array<i64: 1, 4, 8, 8>}]} {
    %c0 = arith.constant 0 : index
    %c0_0 = arith.constant 0 : index
    %c0_1 = arith.constant 0 : index
    %c0_2 = arith.constant 0 : index
    %0 = vector.load %arg4[%c0, %c0_0, %c0_1, %c0_2] : memref<1x4x8x32xf32, #tpu.memory_space<vmem>>, vector<1x4x8x32xf32>
    %1 = vector.shape_cast %0 : vector<1x4x8x32xf32> to vector<4x8x32xf32>
    %c0_3 = arith.constant 0 : index
    %c0_4 = arith.constant 0 : index
    %c0_5 = arith.constant 0 : index
    %c0_6 = arith.constant 0 : index
    %2 = vector.load %arg5[%c0_3, %c0_4, %c0_5, %c0_6] : memref<1x4x8x32xf32, #tpu.memory_space<vmem>>, vector<1x4x8x32xf32>
    %3 = vector.shape_cast %2 : vector<1x4x8x32xf32> to vector<4x8x32xf32>
    %cst = arith.constant dense<0.000000e+00> : vector<4x8x8xf32>
    %4 = tpu.matmul %1, %3, %cst {dimension_numbers = #tpu.dot_dimension_numbers<[2], [2], [1], [1], [0, 0, 0, 1, 1, 1], [0], [0]>} : vector<4x8x32xf32>, vector<4x8x32xf32>, vector<4x8x8xf32> -> vector<4x8x8xf32>
    %cst_7 = arith.constant 0.176776692 : f32
    %5 = vector.broadcast %cst_7 : f32 to vector<4x8x8xf32>
    %6 = arith.mulf %4, %5 : vector<4x8x8xf32>
    %cst_8 = arith.constant dense<0xFF800000> : vector<4x8xf32>
    %7 = vector.multi_reduction <maximumf>, %6, %cst_8 [2] : vector<4x8x8xf32> to vector<4x8xf32>
    %8 = vector.shape_cast %7 : vector<4x8xf32> to vector<4x8x1xf32>
    %9 = vector.broadcast %8 : vector<4x8x1xf32> to vector<4x8x8xf32>
    %10 = arith.subf %6, %9 : vector<4x8x8xf32>
    %11 = math.exp %10 : vector<4x8x8xf32>
    %cst_9 = arith.constant dense<0.000000e+00> : vector<4x8xf32>
    %12 = vector.multi_reduction <add>, %11, %cst_9 [2] : vector<4x8x8xf32> to vector<4x8xf32>
    %13 = vector.shape_cast %12 : vector<4x8xf32> to vector<4x8x1xf32>
    %14 = vector.broadcast %13 : vector<4x8x1xf32> to vector<4x8x8xf32>
    %15 = arith.divf %11, %14 : vector<4x8x8xf32>
    %c0_10 = arith.constant 0 : index
    %c0_11 = arith.constant 0 : index
    %c0_12 = arith.constant 0 : index
    %c0_13 = arith.constant 0 : index
    %16 = vector.load %arg6[%c0_10, %c0_11, %c0_12, %c0_13] : memref<1x4x8x32xf32, #tpu.memory_space<vmem>>, vector<1x4x8x32xf32>
    %17 = vector.shape_cast %16 : vector<1x4x8x32xf32> to vector<4x8x32xf32>
    %cst_14 = arith.constant dense<0.000000e+00> : vector<4x8x32xf32>
    %18 = tpu.matmul %15, %17, %cst_14 {dimension_numbers = #tpu.dot_dimension_numbers<[2], [1], [1], [2], [0, 0, 0, 1, 1, 2], [0], [0]>} : vector<4x8x8xf32>, vector<4x8x32xf32>, vector<4x8x32xf32> -> vector<4x8x32xf32>
    %c0_15 = arith.constant 0 : index
    %c0_16 = arith.constant 0 : index
    %c0_17 = arith.constant 0 : index
    %c0_18 = arith.constant 0 : index
    %19 = vector.load %arg7[%c0_15, %c0_16, %c0_17, %c0_18] : memref<1x4x8x32xf32, #tpu.memory_space<vmem>>, vector<1x4x8x32xf32>
    %20 = vector.shape_cast %19 : vector<1x4x8x32xf32> to vector<4x8x32xf32>
    %21 = vector.shape_cast %18 : vector<4x8x32xf32> to vector<1x4x8x32xf32>
    tpu.vector_store %arg7[%c0_15, %c0_16, %c0_17, %c0_18], %21 {strides = array<i32>} : memref<1x4x8x32xf32, #tpu.memory_space<vmem>>, vector<1x4x8x32xf32>,
    %c0_19 = arith.constant 0 : index
    %c0_20 = arith.constant 0 : index
    %c0_21 = arith.constant 0 : index
    %c0_22 = arith.constant 0 : index
    %22 = vector.load %arg8[%c0_19, %c0_20, %c0_21, %c0_22] : memref<1x4x8x8xf32, #tpu.memory_space<vmem>>, vector<1x4x8x8xf32>
    %23 = vector.shape_cast %22 : vector<1x4x8x8xf32> to vector<4x8x8xf32>
    %24 = vector.shape_cast %15 : vector<4x8x8xf32> to vector<1x4x8x8xf32>
    tpu.vector_store %arg8[%c0_19, %c0_20, %c0_21, %c0_22], %24 {strides = array<i32>} : memref<1x4x8x8xf32, #tpu.memory_space<vmem>>, vector<1x4x8x8xf32>,
    return
  }
  func.func @transform_0(%arg0: i32, %arg1: i32, %arg2: i32, %arg3: memref<1xi32, #tpu.memory_space<smem>>) -> (i32, i32, i32, i32) {
    %c0_i32 = arith.constant 0 : i32
    %c0_i32_0 = arith.constant 0 : i32
    return %arg0, %arg1, %arg2, %c0_i32 : i32, i32, i32, i32
  }
  func.func @transform_1(%arg0: i32, %arg1: i32, %arg2: i32, %arg3: memref<1xi32, #tpu.memory_space<smem>>) -> (i32, i32, i32, i32) {
    %c0_i32 = arith.constant 0 : i32
    %c0_i32_0 = arith.constant 0 : i32
    %c0_i32_1 = arith.constant 0 : i32
    return %arg0, %arg1, %c0_i32, %c0_i32_0 : i32, i32, i32, i32
  }
  func.func @transform_2(%arg0: i32, %arg1: i32, %arg2: i32, %arg3: memref<1xi32, #tpu.memory_space<smem>>) -> (i32, i32, i32, i32) {
    %c0_i32 = arith.constant 0 : i32
    %c0_i32_0 = arith.constant 0 : i32
    %c0_i32_1 = arith.constant 0 : i32
    return %arg0, %arg1, %c0_i32, %c0_i32_0 : i32, i32, i32, i32
  }
  func.func @transform_3(%arg0: i32, %arg1: i32, %arg2: i32, %arg3: memref<1xi32, #tpu.memory_space<smem>>) -> (i32, i32, i32, i32) {
    %c0_i32 = arith.constant 0 : i32
    %c0_i32_0 = arith.constant 0 : i32
    return %arg0, %arg1, %arg2, %c0_i32 : i32, i32, i32, i32
  }
  func.func @transform_4(%arg0: i32, %arg1: i32, %arg2: i32, %arg3: memref<1xi32, #tpu.memory_space<smem>>) -> (i32, i32, i32, i32) {
    %c0_i32 = arith.constant 0 : i32
    %c0_i32_0 = arith.constant 0 : i32
    return %arg0, %arg1, %arg2, %c0_i32 : i32, i32, i32, i32
  }
}

</mosaic_0001>

<llo_original>
// kernel: tpu_custom_call.1
$region0: #{tpu_custom_call.1}
  #allocation0 [shape = 'u32[]', space=smem, size = 0x4, offset = 0x4, fixed_abs, tag = 'smem constant byte address 0x4 - core index']
  #allocation1 [shape = 'u32[144,128]{1,0:T(1,128)}', space=vmem, size = 0x12000, scoped, tag = 'internal scratch']
  #allocation2 [shape = 's32[1]{0}', space=sflag, size = 0x4, scoped, tag = 'scoped memory for tpu_custom_call.1']
  #allocation3 [shape = 's32[1]{0:T(128)S(6)}', space=smem, size = 0x200, scoped, tag = 'prefetched SMEM operand 0']
  %s0 = inlined_call_operand.<no memory space> [shape: s32[1], index: 0, kind: input, shape index: {}]
  %s1 = inlined_call_operand.hbm [shape: f32[2,4,8,32], index: 1, kind: input, shape index: {}]
  %s2 = inlined_call_operand.hbm [shape: f32[2,4,8,32], index: 2, kind: input, shape index: {}]
  %s3 = inlined_call_operand.hbm [shape: f32[2,4,8,32], index: 3, kind: input, shape index: {}]
  %s4 = inlined_call_operand.hbm [shape: f32[2,4,8,32], index: 4, kind: output, shape index: {0}]
  %s5 = inlined_call_operand.hbm [shape: f32[2,4,8,8], index: 5, kind: output, shape index: {1}]
  %6 = xla_tuple %s4, %s5
  %s7 = sld [smem:[#allocation0]]
  $region65: #{tpu_custom_call.1} parent=0
    _
  %s9 = ssub.s32 1, %s7
  %s10 = scalar_select 0, %s9, %s7
  %11 = sst [smem:[#allocation3]] %s0
  $region1: #{tpu_custom_call.1} parent=0
    #allocation4 [shape = 'u8[32768]{0}', space=vmem, size = 0x8000, scoped, tag = 'input window, operand 1']
    #allocation5 [shape = 's32[2]{0}', space=sflag, size = 0x8, scoped, tag = 'scoped memory for tpu_custom_call.1']
    #allocation6 [shape = 's32[2]{0}', space=sflag, size = 0x8, scoped, tag = 'scoped memory for tpu_custom_call.1']
    #allocation7 [shape = 'u8[32768]{0}', space=vmem, size = 0x8000, scoped, tag = 'input window, operand 2']
    #allocation8 [shape = 's32[2]{0}', space=sflag, size = 0x8, scoped, tag = 'scoped memory for tpu_custom_call.1']
    #allocation9 [shape = 'u8[32768]{0}', space=vmem, size = 0x8000, scoped, tag = 'input window, operand 3']
    #allocation10 [shape = 'u8[32768]{0}', space=vmem, size = 0x8000, scoped, tag = 'output window, operand 0']
    #allocation11 [shape = 'u8[32768]{0}', space=vmem, size = 0x8000, scoped, tag = 'output window, operand 1']
    #allocation12 [shape = 's32[2]{0}', space=sflag, size = 0x8, scoped, tag = 'scoped memory for tpu_custom_call.1']
    %12 = vsyncpa [#allocation5], 0
    %s13 = scalar_lea.sflag [#allocation5], 1
    %14 = vsyncpa %s13, 0
    %15 = vsyncpa [#allocation8], 0
    %s16 = scalar_lea.sflag [#allocation8], 1
    %17 = vsyncpa %s16, 0
    %18 = vsyncpa [#allocation6], 0
    %s19 = scalar_lea.sflag [#allocation6], 1
    %20 = vsyncpa %s19, 0
    %21 = vsyncpa [#allocation12], 0
    %s22 = scalar_lea.sflag [#allocation12], 1
    %23 = vsyncpa %s22, 0
    loop: start=0, step=1, limit=4
    $region2: #{tpu_custom_call.1} parent=1 // loop_pre_header
      _
    $region3: #{tpu_custom_call.1} parent=1 // loop_header
      %s25 = sphi 0, %s29
      %p26 = scmp.ge.s32.totalorder %s25, 4
      %s32 = sphi 0, %s51
      %s33 = sphi 0, %s47
      %s34 = sphi 0, %s43
      %s35 = sphi 0, %s32
      %s36 = sphi 0, %s33
      %s37 = sphi 0, %s34
      %s38 = sphi 0, %s35
      %s39 = sphi 0, %s36
      %s40 = sphi 0, %s37
      %s58 = sphi 0, %s60
      %s61 = sphi 0, %s58
      %s62 = sphi 0, %s61
      %s78 = sphi 0, %s62
      %s86 = sphi 0, %s88
      %s89 = sphi 0, %s86
      %s90 = sphi 0, %s89
      %s106 = sphi 0, %s90
      %s114 = sphi 0, %s116
      %s117 = sphi 0, %s114
      %s118 = sphi 0, %s117
      %s134 = sphi 0, %s118
      %s144 = sphi 0, %s146
      %s147 = sphi 0, %s144
      %s148 = sphi 0, %s147
      %s164 = sphi 0, %s148
      %s174 = sphi 0, %s176
      %s177 = sphi 0, %s174
      %s178 = sphi 0, %s177
      %s194 = sphi 0, %s178
    $region4: #{tpu_custom_call.1} parent=1 // loop_header_branch
      %28 = sbr.rel (%p26) target = $region8
    $region5: #{tpu_custom_call.1} parent=1 // loop_body
      %s30 = ssub.s32 %s25, 1
      %s31 = ssub.s32 %s25, 2
      %s41 = sadd.s32 1, %s34
      %p42 = scmp.ge.s32.totalorder %s41, 1
      %s43 = scalar_select %p42, 0, %s41
      %s44 = sadd.s32 1, %s33
      %s45 = scalar_select %p42, %s44, %s33
      %p46 = scmp.ge.s32.totalorder %s45, 1
      %s47 = scalar_select %p46, 0, %s45
      %s48 = sadd.s32 1, %s32
      %s49 = scalar_select %p46, %s48, %s32
      %p50 = scmp.ge.s32.totalorder %s49, 2
      %s51 = scalar_select %p50, 0, %s49
      %s52 = ssub.s32 %s32, %s51
      %s53 = ssub.s32 %s33, %s47
      %s54 = sor.u32 %s52, %s53
      %s55 = ssub.s32 %s34, %s43
      %s56 = sor.u32 %s54, %s55
      %p57 = scmp.eq.s32.totalorder %s56, 0
      %s59 = sadd.s32 %s58, 1
      %s60 = scalar_select %p57, %s58, %s59
      %p63 = pneg %p57
      %p64 = scmp.eq.s32.totalorder %s25, 1
      %p65 = por %p63, %p64
      %p66 = scmp.ne.s32.totalorder %s58, %s61
      %p67 = scmp.eq.s32.totalorder %s25, 0
      %p68 = por %p66, %p67
      %p69 = scmp.ne.s32.totalorder %s58, %s61
      %p70 = scmp.eq.s32.totalorder %s30, 1
      %p71 = por %p69, %p70
      %p72 = scmp.ne.s32.totalorder %s61, %s62
      %p73 = scmp.eq.s32.totalorder %s30, 0
      %p74 = por %p72, %p73
      %p75 = scmp.ne.s32.totalorder %s61, %s62
      %p76 = scmp.eq.s32.totalorder %s31, 1
      %p77 = por %p75, %p76
      %p79 = scmp.ne.s32.totalorder %s62, %s78
      %p80 = scmp.eq.s32.totalorder %s31, 0
      %p81 = por %p79, %p80
      %s82 = ssub.s32 %s32, %s51
      %s83 = ssub.s32 %s33, %s47
      %s84 = sor.u32 %s82, %s83
      %p85 = scmp.eq.s32.totalorder %s84, 0
      %s87 = sadd.s32 %s86, 1
      %s88 = scalar_select %p85, %s86, %s87
      %p91 = pneg %p85
      %p92 = scmp.eq.s32.totalorder %s25, 1
      %p93 = por %p91, %p92
      %p94 = scmp.ne.s32.totalorder %s86, %s89
      %p95 = scmp.eq.s32.totalorder %s25, 0
      %p96 = por %p94, %p95
      %p97 = scmp.ne.s32.totalorder %s86, %s89
      %p98 = scmp.eq.s32.totalorder %s30, 1
      %p99 = por %p97, %p98
      %p100 = scmp.ne.s32.totalorder %s89, %s90
      %p101 = scmp.eq.s32.totalorder %s30, 0
      %p102 = por %p100, %p101
      %p103 = scmp.ne.s32.totalorder %s89, %s90
      %p104 = scmp.eq.s32.totalorder %s31, 1
      %p105 = por %p103, %p104
      %p107 = scmp.ne.s32.totalorder %s90, %s106
      %p108 = scmp.eq.s32.totalorder %s31, 0
      %p109 = por %p107, %p108
      %s110 = ssub.s32 %s32, %s51
      %s111 = ssub.s32 %s33, %s47
      %s112 = sor.u32 %s110, %s111
      %p113 = scmp.eq.s32.totalorder %s112, 0
      %s115 = sadd.s32 %s114, 1
      %s116 = scalar_select %p113, %s114, %s115
      %p119 = pneg %p113
      %p120 = scmp.eq.s32.totalorder %s25, 1
      %p121 = por %p119, %p120
      %p122 = scmp.ne.s32.totalorder %s114, %s117
      %p123 = scmp.eq.s32.totalorder %s25, 0
      %p124 = por %p122, %p123
      %p125 = scmp.ne.s32.totalorder %s114, %s117
      %p126 = scmp.eq.s32.totalorder %s30, 1
      %p127 = por %p125, %p126
      %p128 = scmp.ne.s32.totalorder %s117, %s118
      %p129 = scmp.eq.s32.totalorder %s30, 0
      %p130 = por %p128, %p129
      %p131 = scmp.ne.s32.totalorder %s117, %s118
      %p132 = scmp.eq.s32.totalorder %s31, 1
      %p133 = por %p131, %p132
      %p135 = scmp.ne.s32.totalorder %s118, %s134
      %p136 = scmp.eq.s32.totalorder %s31, 0
      %p137 = por %p135, %p136
      %s138 = ssub.s32 %s32, %s51
      %s139 = ssub.s32 %s33, %s47
      %s140 = sor.u32 %s138, %s139
      %s141 = ssub.s32 %s34, %s43
      %s142 = sor.u32 %s140, %s141
      %p143 = scmp.eq.s32.totalorder %s142, 0
      %s145 = sadd.s32 %s144, 1
      %s146 = scalar_select %p143, %s144, %s145
      %p149 = pneg %p143
      %p150 = scmp.eq.s32.totalorder %s25, 1
      %p151 = por %p149, %p150
      %p152 = scmp.ne.s32.totalorder %s144, %s147
      %p153 = scmp.eq.s32.totalorder %s25, 0
      %p154 = por %p152, %p153
      %p155 = scmp.ne.s32.totalorder %s144, %s147
      %p156 = scmp.eq.s32.totalorder %s30, 1
      %p157 = por %p155, %p156
      %p158 = scmp.ne.s32.totalorder %s147, %s148
      %p159 = scmp.eq.s32.totalorder %s30, 0
      %p160 = por %p158, %p159
      %p161 = scmp.ne.s32.totalorder %s147, %s148
      %p162 = scmp.eq.s32.totalorder %s31, 1
      %p163 = por %p161, %p162
      %p165 = scmp.ne.s32.totalorder %s148, %s164
      %p166 = scmp.eq.s32.totalorder %s31, 0
      %p167 = por %p165, %p166
      %s168 = ssub.s32 %s32, %s51
      %s169 = ssub.s32 %s33, %s47
      %s170 = sor.u32 %s168, %s169
      %s171 = ssub.s32 %s34, %s43
      %s172 = sor.u32 %s170, %s171
      %p173 = scmp.eq.s32.totalorder %s172, 0
      %s175 = sadd.s32 %s174, 1
      %s176 = scalar_select %p173, %s174, %s175
      %p179 = pneg %p173
      %p180 = scmp.eq.s32.totalorder %s25, 1
      %p181 = por %p179, %p180
      %p182 = scmp.ne.s32.totalorder %s174, %s177
      %p183 = scmp.eq.s32.totalorder %s25, 0
      %p184 = por %p182, %p183
      %p185 = scmp.ne.s32.totalorder %s174, %s177
      %p186 = scmp.eq.s32.totalorder %s30, 1
      %p187 = por %p185, %p186
      %p188 = scmp.ne.s32.totalorder %s177, %s178
      %p189 = scmp.eq.s32.totalorder %s30, 0
      %p190 = por %p188, %p189
      %p191 = scmp.ne.s32.totalorder %s177, %s178
      %p192 = scmp.eq.s32.totalorder %s31, 1
      %p193 = por %p191, %p192
      %p195 = scmp.ne.s32.totalorder %s178, %s194
      %p196 = scmp.eq.s32.totalorder %s31, 0
      %p197 = por %p195, %p196
      %p198 = scmp.le.s32.totalorder 1, %s25
      %p199 = scmp.lt.s32.totalorder %s25, 3
      %p200 = pnand %p198, %p199
      %p201 = pneg %p200
      // Predicated region
      $region9: #{tpu_custom_call.1} parent=5 // pred_check
        _
      $region10: #{tpu_custom_call.1} parent=5 // pred_check_branch
        %203 = sbr.rel (%p200) target = $region12
      $region11: #{tpu_custom_call.1} parent=5 // pred_region
        %s204 = ssub.s32 %s25, 1
      $region12: #{tpu_custom_call.1} parent=5 // pred_fallthru
        _
      %p205 = scmp.lt.s32.totalorder %s25, 2
      // Predicated region
      $region13: #{tpu_custom_call.1} parent=5 // pred_check
        %p206 = pneg %p205
      $region14: #{tpu_custom_call.1} parent=5 // pred_check_branch
        %208 = sbr.rel (%p206) target = $region16
      $region15: #{tpu_custom_call.1} parent=5 // pred_region
        // Predicated region
        $region17: #{tpu_custom_call.1} parent=15 // pred_check
          %p209 = pneg %p68
        $region18: #{tpu_custom_call.1} parent=15 // pred_check_branch
          %211 = sbr.rel (%p209) target = $region20
        $region19: #{tpu_custom_call.1} parent=15 // pred_region
          %s212 = sand.u32 %s58, 1
          %s213 = scalar_lea.sflag [#allocation5], %s212
          %s214 = sand.u32 %s58, 1
          %s215 = smul.addr %s214, 32
          %s216 = scalar_lea.vmem [#allocation4], %s215
          %s217 = smul.u32 4, %s33
          %s219 = ssub.s32 512, 512
          %220 = vsyncadd %s213, %s219
          %s221 = sadd.s32 %s34, %s217
          %s222 = smul.addr %s32, 4
          %s223 = sadd.s32 %s221, %s222
          %s224 = smul.addr %s223, 128
          %s225 = scalar_lea.hbm %s1, %s224
          %s226 = sshll.u32 %s216, 4
          %s227 = int_to_ptr.vmem [resolvable:$true] %s226
          %232 = dma.hbm_to_vmem [thread:$0]  %s225, 512, %s227, %s213, 128, 128, 8
        $region20: #{tpu_custom_call.1} parent=15 // pred_fallthru
          _
        // Predicated region
        $region21: #{tpu_custom_call.1} parent=15 // pred_check
          %p233 = pneg %p96
        $region22: #{tpu_custom_call.1} parent=15 // pred_check_branch
          %235 = sbr.rel (%p233) target = $region24
        $region23: #{tpu_custom_call.1} parent=15 // pred_region
          %s236 = sand.u32 %s25, 1
          %s237 = scalar_lea.sflag [#allocation8], %s236
          %s238 = sand.u32 %s86, 1
          %s239 = smul.addr %s238, 32
          %s240 = scalar_lea.vmem [#allocation7], %s239
          %s241 = smul.u32 4, %s33
          %s243 = ssub.s32 512, 512
          %244 = vsyncadd %s237, %s243
          %s245 = smul.addr %s32, 4
          %s246 = sadd.s32 %s241, %s245
          %s247 = smul.addr %s246, 128
          %s248 = scalar_lea.hbm %s2, %s247
          %s249 = sshll.u32 %s240, 4
          %s250 = int_to_ptr.vmem [resolvable:$true] %s249
          %255 = dma.hbm_to_vmem [thread:$0]  %s248, 512, %s250, %s237, 128, 128, 8
        $region24: #{tpu_custom_call.1} parent=15 // pred_fallthru
          _
        // Predicated region
        $region25: #{tpu_custom_call.1} parent=15 // pred_check
          %p256 = pneg %p124
        $region26: #{tpu_custom_call.1} parent=15 // pred_check_branch
          %258 = sbr.rel (%p256) target = $region28
        $region27: #{tpu_custom_call.1} parent=15 // pred_region
          %s259 = sand.u32 %s25, 1
          %s260 = scalar_lea.sflag [#allocation8], %s259
          %s261 = sand.u32 %s114, 1
          %s262 = smul.addr %s261, 32
          %s263 = scalar_lea.vmem [#allocation9], %s262
          %s264 = smul.u32 4, %s33
          %s266 = ssub.s32 512, 512
          %267 = vsyncadd %s260, %s266
          %s268 = smul.addr %s32, 4
          %s269 = sadd.s32 %s264, %s268
          %s270 = smul.addr %s269, 128
          %s271 = scalar_lea.hbm %s3, %s270
          %s272 = sshll.u32 %s263, 4
          %s273 = int_to_ptr.vmem [resolvable:$true] %s272
          %278 = dma.hbm_to_vmem [thread:$0]  %s271, 512, %s273, %s260, 128, 128, 8
        $region28: #{tpu_custom_call.1} parent=15 // pred_fallthru
          _
      $region16: #{tpu_custom_call.1} parent=5 // pred_fallthru
        _
      %p279 = scmp.le.s32.totalorder 1, %s25
      %p280 = scmp.lt.s32.totalorder %s25, 3
      %p281 = pnand %p279, %p280
      %p282 = pneg %p281
      // Predicated region
      $region29: #{tpu_custom_call.1} parent=5 // pred_check
        _
      $region30: #{tpu_custom_call.1} parent=5 // pred_check_branch
        %284 = sbr.rel (%p281) target = $region32
      $region31: #{tpu_custom_call.1} parent=5 // pred_region
        %s285 = ssub.s32 %s25, 1
        %s286 = sand.u32 %s61, 1
        %s287 = scalar_lea.sflag [#allocation5], %s286
        %s288 = sand.u32 %s61, 1
        %s289 = smul.addr %s288, 32
        %s290 = scalar_lea.vmem [#allocation4], %s289
        // Predicated region
        $region33: #{tpu_custom_call.1} parent=31 // pred_check
          %p291 = pneg %p74
        $region34: #{tpu_custom_call.1} parent=31 // pred_check_branch
          %293 = sbr.rel (%p291) target = $region36
        $region35: #{tpu_custom_call.1} parent=31 // pred_region
          %294 = dma.done %s287, 512
        $region36: #{tpu_custom_call.1} parent=31 // pred_fallthru
          _
        %s295 = sand.u32 %s30, 1
        %s296 = scalar_lea.sflag [#allocation8], %s295
        %s297 = sand.u32 %s89, 1
        %s298 = smul.addr %s297, 32
        %s299 = scalar_lea.vmem [#allocation7], %s298
        // Predicated region
        $region37: #{tpu_custom_call.1} parent=31 // pred_check
          %p300 = pneg %p102
        $region38: #{tpu_custom_call.1} parent=31 // pred_check_branch
          %302 = sbr.rel (%p300) target = $region40
        $region39: #{tpu_custom_call.1} parent=31 // pred_region
          %303 = dma.done %s296, 512
        $region40: #{tpu_custom_call.1} parent=31 // pred_fallthru
          _
        %s304 = sand.u32 %s30, 1
        %s305 = scalar_lea.sflag [#allocation8], %s304
        %s306 = sand.u32 %s117, 1
        %s307 = smul.addr %s306, 32
        %s308 = scalar_lea.vmem [#allocation9], %s307
        // Predicated region
        $region41: #{tpu_custom_call.1} parent=31 // pred_check
          %p309 = pneg %p130
        $region42: #{tpu_custom_call.1} parent=31 // pred_check_branch
          %311 = sbr.rel (%p309) target = $region44
        $region43: #{tpu_custom_call.1} parent=31 // pred_region
          %312 = dma.done %s305, 512
        $region44: #{tpu_custom_call.1} parent=31 // pred_fallthru
          _
        %s313 = sand.u32 %s61, 1
        %s314 = scalar_lea.sflag [#allocation5], %s313
        %s315 = sand.u32 %s61, 1
        %s316 = smul.addr %s315, 32
        %s317 = scalar_lea.vmem [#allocation4], %s316
        %p318 = pneg %p74
        %p319 = pneg %p71
        %s320 = sand.u32 %s30, 1
        %s321 = scalar_lea.sflag [#allocation8], %s320
        %s322 = sand.u32 %s89, 1
        %s323 = smul.addr %s322, 32
        %s324 = scalar_lea.vmem [#allocation7], %s323
        %p325 = pneg %p102
        %p326 = pneg %p99
        %s327 = sand.u32 %s30, 1
        %s328 = scalar_lea.sflag [#allocation8], %s327
        %s329 = sand.u32 %s117, 1
        %s330 = smul.addr %s329, 32
        %s331 = scalar_lea.vmem [#allocation9], %s330
        %p332 = pneg %p130
        %p333 = pneg %p127
        %p334 = pneg %p160
        %p335 = pneg %p157
        %s336 = sand.u32 %s147, 1
        %s337 = scalar_lea.sflag [#allocation6], %s336
        %s338 = sand.u32 %s147, 1
        %s339 = smul.addr %s338, 32
        %s340 = scalar_lea.vmem [#allocation10], %s339
        %p341 = pneg %p190
        %p342 = pneg %p187
        %s343 = sand.u32 %s177, 1
        %s344 = scalar_lea.sflag [#allocation12], %s343
        %s345 = sand.u32 %s177, 1
        %s346 = smul.addr %s345, 32
        %s347 = scalar_lea.vmem [#allocation11], %s346
        %s348 = smul.u32 4, %s36
        %s349 = smul.u32 4, %s36
        %s350 = smul.u32 4, %s36
        %s351 = smul.u32 4, %s36
        %s352 = smul.u32 4, %s36
        %v353 = vld [vmem:[%s290] sm:$0xff]
        %v354 = vld [vmem:[%s290 + $0x8] sm:$0xff]
        %v355 = vld [vmem:[%s290 + $0x10] sm:$0xff]
        %v356 = vld [vmem:[%s290 + $0x18] sm:$0xff]
        %v357 = vld [vmem:[%s299] sm:$0xff]
        %v358 = vld [vmem:[%s299 + $0x8] sm:$0xff]
        %v359 = vld [vmem:[%s299 + $0x10] sm:$0xff]
        %v360 = vld [vmem:[%s299 + $0x18] sm:$0xff]
        %vm361 = vcmask 261120
        %v363 = vsel %vm361, %v353, 0
        %v366 = vsel %vm361, %v357, 0
        %368 = vmatprep.subr.mxu0 0.0
        %369 = vmatpush1.xpose.msra.mxu0 %v366
        %370 = vmatprep.subr.mxu0 0.0
        %371 = vmatpush1.xpose.msra.mxu0 0.0
        %372 = vmatprep.subr.mxu0 0.0
        %373 = vmatpush1.xpose.msra.mxu0 0.0
        %374 = vmatprep.subr.mxu0 0.0
        %375 = vmatpush1.xpose.msra.mxu0 0.0
        %376 = vmatprep.subr.mxu0 0.0
        %377 = vmatpush1.xpose.msra.mxu0 0.0
        %378 = vmatprep.subr.mxu0 0.0
        %379 = vmatpush1.xpose.msra.mxu0 0.0
        %380 = vmatprep.subr.mxu0 0.0
        %381 = vmatpush1.xpose.msra.mxu0 0.0
        %382 = vmatprep.subr.mxu0 0.0
        %383 = vmatpush1.xpose.msra.mxu0 0.0
        %384 = vmatprep.subr.mxu0 0.0
        %385 = vmatpush1.xpose.msra.mxu0 0.0
        %386 = vmatprep.subr.mxu0 0.0
        %387 = vmatpush1.xpose.msra.mxu0 0.0
        %388 = vmatprep.subr.mxu0 0.0
        %389 = vmatpush1.xpose.msra.mxu0 0.0
        %390 = vmatprep.subr.mxu0 0.0
        %391 = vmatpush1.xpose.msra.mxu0 0.0
        %392 = vmatprep.subr.mxu0 0.0
        %393 = vmatpush1.xpose.msra.mxu0 0.0
        %394 = vmatprep.subr.mxu0 0.0
        %395 = vmatpush1.xpose.msra.mxu0 0.0
        %396 = vmatprep.subr.mxu0 0.0
        %397 = vmatpush1.xpose.msra.mxu0 0.0
        %398 = vmatprep.subr.mxu0 0.0
        %399 = vmatpush1.xpose.msra.mxu0 0.0
        %400 = vmatprep.subr.mxu0 0.0
        %401 = vmatpush1.xpose.msra.mxu0 0.0
        %402 = vmatprep.subr.mxu0 0.0
        %403 = vmatpush1.xpose.msra.mxu0 0.0
        %404 = vmatprep.subr.mxu0 0.0
        %405 = vmatpush1.xpose.msra.mxu0 0.0
        %406 = vmatprep.subr.mxu0 0.0
        %407 = vmatpush1.xpose.msra.mxu0 0.0
        %408 = vmatprep.subr.mxu0 0.0
        %409 = vmatpush1.xpose.msra.mxu0 0.0
        %410 = vmatprep.subr.mxu0 0.0
        %411 = vmatpush1.xpose.msra.mxu0 0.0
        %412 = vmatprep.subr.mxu0 0.0
        %413 = vmatpush1.xpose.msra.mxu0 0.0
        %414 = vmatprep.subr.mxu0 0.0
        %415 = vmatpush1.xpose.msra.mxu0 0.0
        %416 = vmatprep.subr.mxu0 0.0
        %417 = vmatpush1.xpose.msra.mxu0 0.0
        %418 = vmatprep.subr.mxu0 0.0
        %419 = vmatpush1.xpose.msra.mxu0 0.0
        %420 = vmatprep.subr.mxu0 0.0
        %421 = vmatpush1.xpose.msra.mxu0 0.0
        %422 = vmatprep.subr.mxu0 0.0
        %423 = vmatpush1.xpose.msra.mxu0 0.0
        %424 = vmatprep.subr.mxu0 0.0
        %425 = vmatpush1.xpose.msra.mxu0 0.0
        %426 = vmatprep.subr.mxu0 0.0
        %427 = vmatpush1.xpose.msra.mxu0 0.0
        %428 = vmatprep.subr.mxu0 0.0
        %429 = vmatpush1.xpose.msra.mxu0 0.0
        %430 = vmatprep.subr.mxu0 0.0
        %431 = vmatpush1.xpose.msra.mxu0 0.0
        %432 = vmatprep.mubr.f32.mxu0 0.0
        %433 = vmatmul.mubr.f32.gmra.mrb[0].mxu0 %v363
        %v434 = vpop.f32.mrb[0].mxu0
        %v435 = vadd.f32 0.0, %v434
        %v436 = vpop.f32.mrb[0].mxu0
        %437 = vdwg.mxu0
        %v439 = vsel %vm361, %v354, 0
        %v442 = vsel %vm361, %v358, 0
        %444 = vmatprep.subr.mxu0 0.0
        %445 = vmatpush1.xpose.msra.mxu0 %v442
        %446 = vmatprep.subr.mxu0 0.0
        %447 = vmatpush1.xpose.msra.mxu0 0.0
        %448 = vmatprep.subr.mxu0 0.0
        %449 = vmatpush1.xpose.msra.mxu0 0.0
        %450 = vmatprep.subr.mxu0 0.0
        %451 = vmatpush1.xpose.msra.mxu0 0.0
        %452 = vmatprep.subr.mxu0 0.0
        %453 = vmatpush1.xpose.msra.mxu0 0.0
        %454 = vmatprep.subr.mxu0 0.0
        %455 = vmatpush1.xpose.msra.mxu0 0.0
        %456 = vmatprep.subr.mxu0 0.0
        %457 = vmatpush1.xpose.msra.mxu0 0.0
        %458 = vmatprep.subr.mxu0 0.0
        %459 = vmatpush1.xpose.msra.mxu0 0.0
        %460 = vmatprep.subr.mxu0 0.0
        %461 = vmatpush1.xpose.msra.mxu0 0.0
        %462 = vmatprep.subr.mxu0 0.0
        %463 = vmatpush1.xpose.msra.mxu0 0.0
        %464 = vmatprep.subr.mxu0 0.0
        %465 = vmatpush1.xpose.msra.mxu0 0.0
        %466 = vmatprep.subr.mxu0 0.0
        %467 = vmatpush1.xpose.msra.mxu0 0.0
        %468 = vmatprep.subr.mxu0 0.0
        %469 = vmatpush1.xpose.msra.mxu0 0.0
        %470 = vmatprep.subr.mxu0 0.0
        %471 = vmatpush1.xpose.msra.mxu0 0.0
        %472 = vmatprep.subr.mxu0 0.0
        %473 = vmatpush1.xpose.msra.mxu0 0.0
        %474 = vmatprep.subr.mxu0 0.0
        %475 = vmatpush1.xpose.msra.mxu0 0.0
        %476 = vmatprep.subr.mxu0 0.0
        %477 = vmatpush1.xpose.msra.mxu0 0.0
        %478 = vmatprep.subr.mxu0 0.0
        %479 = vmatpush1.xpose.msra.mxu0 0.0
        %480 = vmatprep.subr.mxu0 0.0
        %481 = vmatpush1.xpose.msra.mxu0 0.0
        %482 = vmatprep.subr.mxu0 0.0
        %483 = vmatpush1.xpose.msra.mxu0 0.0
        %484 = vmatprep.subr.mxu0 0.0
        %485 = vmatpush1.xpose.msra.mxu0 0.0
        %486 = vmatprep.subr.mxu0 0.0
        %487 = vmatpush1.xpose.msra.mxu0 0.0
        %488 = vmatprep.subr.mxu0 0.0
        %489 = vmatpush1.xpose.msra.mxu0 0.0
        %490 = vmatprep.subr.mxu0 0.0
        %491 = vmatpush1.xpose.msra.mxu0 0.0
        %492 = vmatprep.subr.mxu0 0.0
        %493 = vmatpush1.xpose.msra.mxu0 0.0
        %494 = vmatprep.subr.mxu0 0.0
        %495 = vmatpush1.xpose.msra.mxu0 0.0
        %496 = vmatprep.subr.mxu0 0.0
        %497 = vmatpush1.xpose.msra.mxu0 0.0
        %498 = vmatprep.subr.mxu0 0.0
        %499 = vmatpush1.xpose.msra.mxu0 0.0
        %500 = vmatprep.subr.mxu0 0.0
        %501 = vmatpush1.xpose.msra.mxu0 0.0
        %502 = vmatprep.subr.mxu0 0.0
        %503 = vmatpush1.xpose.msra.mxu0 0.0
        %504 = vmatprep.subr.mxu0 0.0
        %505 = vmatpush1.xpose.msra.mxu0 0.0
        %506 = vmatprep.subr.mxu0 0.0
        %507 = vmatpush1.xpose.msra.mxu0 0.0
        %508 = vmatprep.mubr.f32.mxu0 0.0
        %509 = vmatmul.mubr.f32.gmra.mrb[0].mxu0 %v439
        %v510 = vpop.f32.mrb[0].mxu0
        %v511 = vadd.f32 0.0, %v510
        %v512 = vpop.f32.mrb[0].mxu0
        %513 = vdwg.mxu0
        %v515 = vsel %vm361, %v355, 0
        %v518 = vsel %vm361, %v359, 0
        %520 = vmatprep.subr.mxu0 0.0
        %521 = vmatpush1.xpose.msra.mxu0 %v518
        %522 = vmatprep.subr.mxu0 0.0
        %523 = vmatpush1.xpose.msra.mxu0 0.0
        %524 = vmatprep.subr.mxu0 0.0
        %525 = vmatpush1.xpose.msra.mxu0 0.0
        %526 = vmatprep.subr.mxu0 0.0
        %527 = vmatpush1.xpose.msra.mxu0 0.0
        %528 = vmatprep.subr.mxu0 0.0
        %529 = vmatpush1.xpose.msra.mxu0 0.0
        %530 = vmatprep.subr.mxu0 0.0
        %531 = vmatpush1.xpose.msra.mxu0 0.0
        %532 = vmatprep.subr.mxu0 0.0
        %533 = vmatpush1.xpose.msra.mxu0 0.0
        %534 = vmatprep.subr.mxu0 0.0
        %535 = vmatpush1.xpose.msra.mxu0 0.0
        %536 = vmatprep.subr.mxu0 0.0
        %537 = vmatpush1.xpose.msra.mxu0 0.0
        %538 = vmatprep.subr.mxu0 0.0
        %539 = vmatpush1.xpose.msra.mxu0 0.0
        %540 = vmatprep.subr.mxu0 0.0
        %541 = vmatpush1.xpose.msra.mxu0 0.0
        %542 = vmatprep.subr.mxu0 0.0
        %543 = vmatpush1.xpose.msra.mxu0 0.0
        %544 = vmatprep.subr.mxu0 0.0
        %545 = vmatpush1.xpose.msra.mxu0 0.0
        %546 = vmatprep.subr.mxu0 0.0
        %547 = vmatpush1.xpose.msra.mxu0 0.0
        %548 = vmatprep.subr.mxu0 0.0
        %549 = vmatpush1.xpose.msra.mxu0 0.0
        %550 = vmatprep.subr.mxu0 0.0
        %551 = vmatpush1.xpose.msra.mxu0 0.0
        %552 = vmatprep.subr.mxu0 0.0
        %553 = vmatpush1.xpose.msra.mxu0 0.0
        %554 = vmatprep.subr.mxu0 0.0
        %555 = vmatpush1.xpose.msra.mxu0 0.0
        %556 = vmatprep.subr.mxu0 0.0
        %557 = vmatpush1.xpose.msra.mxu0 0.0
        %558 = vmatprep.subr.mxu0 0.0
        %559 = vmatpush1.xpose.msra.mxu0 0.0
        %560 = vmatprep.subr.mxu0 0.0
        %561 = vmatpush1.xpose.msra.mxu0 0.0
        %562 = vmatprep.subr.mxu0 0.0
        %563 = vmatpush1.xpose.msra.mxu0 0.0
        %564 = vmatprep.subr.mxu0 0.0
        %565 = vmatpush1.xpose.msra.mxu0 0.0
        %566 = vmatprep.subr.mxu0 0.0
        %567 = vmatpush1.xpose.msra.mxu0 0.0
        %568 = vmatprep.subr.mxu0 0.0
        %569 = vmatpush1.xpose.msra.mxu0 0.0
        %570 = vmatprep.subr.mxu0 0.0
        %571 = vmatpush1.xpose.msra.mxu0 0.0
        %572 = vmatprep.subr.mxu0 0.0
        %573 = vmatpush1.xpose.msra.mxu0 0.0
        %574 = vmatprep.subr.mxu0 0.0
        %575 = vmatpush1.xpose.msra.mxu0 0.0
        %576 = vmatprep.subr.mxu0 0.0
        %577 = vmatpush1.xpose.msra.mxu0 0.0
        %578 = vmatprep.subr.mxu0 0.0
        %579 = vmatpush1.xpose.msra.mxu0 0.0
        %580 = vmatprep.subr.mxu0 0.0
        %581 = vmatpush1.xpose.msra.mxu0 0.0
        %582 = vmatprep.subr.mxu0 0.0
        %583 = vmatpush1.xpose.msra.mxu0 0.0
        %584 = vmatprep.mubr.f32.mxu0 0.0
        %585 = vmatmul.mubr.f32.gmra.mrb[0].mxu0 %v515
        %v586 = vpop.f32.mrb[0].mxu0
        %v587 = vadd.f32 0.0, %v586
        %v588 = vpop.f32.mrb[0].mxu0
        %589 = vdwg.mxu0
        %v591 = vsel %vm361, %v356, 0
        %v594 = vsel %vm361, %v360, 0
        %596 = vmatprep.subr.mxu0 0.0
        %597 = vmatpush1.xpose.msra.mxu0 %v594
        %598 = vmatprep.subr.mxu0 0.0
        %599 = vmatpush1.xpose.msra.mxu0 0.0
        %600 = vmatprep.subr.mxu0 0.0
        %601 = vmatpush1.xpose.msra.mxu0 0.0
        %602 = vmatprep.subr.mxu0 0.0
        %603 = vmatpush1.xpose.msra.mxu0 0.0
        %604 = vmatprep.subr.mxu0 0.0
        %605 = vmatpush1.xpose.msra.mxu0 0.0
        %606 = vmatprep.subr.mxu0 0.0
        %607 = vmatpush1.xpose.msra.mxu0 0.0
        %608 = vmatprep.subr.mxu0 0.0
        %609 = vmatpush1.xpose.msra.mxu0 0.0
        %610 = vmatprep.subr.mxu0 0.0
        %611 = vmatpush1.xpose.msra.mxu0 0.0
        %612 = vmatprep.subr.mxu0 0.0
        %613 = vmatpush1.xpose.msra.mxu0 0.0
        %614 = vmatprep.subr.mxu0 0.0
        %615 = vmatpush1.xpose.msra.mxu0 0.0
        %616 = vmatprep.subr.mxu0 0.0
        %617 = vmatpush1.xpose.msra.mxu0 0.0
        %618 = vmatprep.subr.mxu0 0.0
        %619 = vmatpush1.xpose.msra.mxu0 0.0
        %620 = vmatprep.subr.mxu0 0.0
        %621 = vmatpush1.xpose.msra.mxu0 0.0
        %622 = vmatprep.subr.mxu0 0.0
        %623 = vmatpush1.xpose.msra.mxu0 0.0
        %624 = vmatprep.subr.mxu0 0.0
        %625 = vmatpush1.xpose.msra.mxu0 0.0
        %626 = vmatprep.subr.mxu0 0.0
        %627 = vmatpush1.xpose.msra.mxu0 0.0
        %628 = vmatprep.subr.mxu0 0.0
        %629 = vmatpush1.xpose.msra.mxu0 0.0
        %630 = vmatprep.subr.mxu0 0.0
        %631 = vmatpush1.xpose.msra.mxu0 0.0
        %632 = vmatprep.subr.mxu0 0.0
        %633 = vmatpush1.xpose.msra.mxu0 0.0
        %634 = vmatprep.subr.mxu0 0.0
        %635 = vmatpush1.xpose.msra.mxu0 0.0
        %636 = vmatprep.subr.mxu0 0.0
        %637 = vmatpush1.xpose.msra.mxu0 0.0
        %638 = vmatprep.subr.mxu0 0.0
        %639 = vmatpush1.xpose.msra.mxu0 0.0
        %640 = vmatprep.subr.mxu0 0.0
        %641 = vmatpush1.xpose.msra.mxu0 0.0
        %642 = vmatprep.subr.mxu0 0.0
        %643 = vmatpush1.xpose.msra.mxu0 0.0
        %644 = vmatprep.subr.mxu0 0.0
        %645 = vmatpush1.xpose.msra.mxu0 0.0
        %646 = vmatprep.subr.mxu0 0.0
        %647 = vmatpush1.xpose.msra.mxu0 0.0
        %648 = vmatprep.subr.mxu0 0.0
        %649 = vmatpush1.xpose.msra.mxu0 0.0
        %650 = vmatprep.subr.mxu0 0.0
        %651 = vmatpush1.xpose.msra.mxu0 0.0
        %652 = vmatprep.subr.mxu0 0.0
        %653 = vmatpush1.xpose.msra.mxu0 0.0
        %654 = vmatprep.subr.mxu0 0.0
        %655 = vmatpush1.xpose.msra.mxu0 0.0
        %656 = vmatprep.subr.mxu0 0.0
        %657 = vmatpush1.xpose.msra.mxu0 0.0
        %658 = vmatprep.subr.mxu0 0.0
        %659 = vmatpush1.xpose.msra.mxu0 0.0
        %660 = vmatprep.mubr.f32.mxu0 0.0
        %661 = vmatmul.mubr.f32.gmra.mrb[0].mxu0 %v591
        %v662 = vpop.f32.mrb[0].mxu0
        %v663 = vadd.f32 0.0, %v662
        %v664 = vpop.f32.mrb[0].mxu0
        %665 = vdwg.mxu0
        %v666 = vmul.f32 %v435, 0.17677669
        %v667 = vmul.f32 %v511, 0.17677669
        %v668 = vmul.f32 %v587, 0.17677669
        %v669 = vmul.f32 %v663, 0.17677669
        %vm670 = vcmask 64512
        %v671 = vsel %vm670, %v666, -inf
        %672 = vmax.xlane.f32.xlu0 %v671
        %v673 = vpop.xlane.xlu0 %672
        %v674 = vsel %vm670, %v667, -inf
        %675 = vmax.xlane.f32.xlu0 %v674
        %v676 = vpop.xlane.xlu0 %675
        %v677 = vsel %vm670, %v668, -inf
        %678 = vmax.xlane.f32.xlu0 %v677
        %v679 = vpop.xlane.xlu0 %678
        %v680 = vsel %vm670, %v669, -inf
        %681 = vmax.xlane.f32.xlu0 %v680
        %v682 = vpop.xlane.xlu0 %681
        %v683 = vsub.f32 %v666, %v673
        %v684 = vsub.f32 %v667, %v676
        %v685 = vsub.f32 %v668, %v679
        %v686 = vsub.f32 %v669, %v682
        %v687 = vmul.f32 %v683, 1.442695
        %v688 = vpow.pop %v687
        %v689 = vmul.f32 %v684, 1.442695
        %v690 = vpow.pop %v689
        %v691 = vmul.f32 %v685, 1.442695
        %v692 = vpow.pop %v691
        %v693 = vmul.f32 %v686, 1.442695
        %v694 = vpow.pop %v693
        %v695 = vsel %vm670, %v688, 0.0
        %696 = vadd.xlane.f32.xlu0 %v695
        %v697 = vpop.xlane.xlu0 %696
        %v698 = vsel %vm670, %v690, 0.0
        %699 = vadd.xlane.f32.xlu0 %v698
        %v700 = vpop.xlane.xlu0 %699
        %v701 = vsel %vm670, %v692, 0.0
        %702 = vadd.xlane.f32.xlu0 %v701
        %v703 = vpop.xlane.xlu0 %702
        %v704 = vsel %vm670, %v694, 0.0
        %705 = vadd.xlane.f32.xlu0 %v704
        %v706 = vpop.xlane.xlu0 %705
        %v707 = vrcp.pop %v697
        %v708 = vmul.f32 %v688, %v707
        %v709 = vrcp.pop %v700
        %v710 = vmul.f32 %v690, %v709
        %v711 = vrcp.pop %v703
        %v712 = vmul.f32 %v692, %v711
        %v713 = vrcp.pop %v706
        %v714 = vmul.f32 %v694, %v713
        %v715 = vld [vmem:[%s308] sm:$0xff]
        %v716 = vld [vmem:[%s308 + $0x8] sm:$0xff]
        %v717 = vld [vmem:[%s308 + $0x10] sm:$0xff]
        %v718 = vld [vmem:[%s308 + $0x18] sm:$0xff]
        %v720 = vsel %vm670, %v708, 0
        %722 = vmatprep.subr.mxu0 0.0
        %723 = vmatpush1.msra.mxu0 %v715
        %724 = vmatprep.subr.mxu0 0.0
        %725 = vmatpush1.msra.mxu0 0.0
        %726 = vmatprep.subr.mxu0 0.0
        %727 = vmatpush1.msra.mxu0 0.0
        %728 = vmatprep.subr.mxu0 0.0
        %729 = vmatpush1.msra.mxu0 0.0
        %730 = vmatprep.subr.mxu0 0.0
        %731 = vmatpush1.msra.mxu0 0.0
        %732 = vmatprep.subr.mxu0 0.0
        %733 = vmatpush1.msra.mxu0 0.0
        %734 = vmatprep.subr.mxu0 0.0
        %735 = vmatpush1.msra.mxu0 0.0
        %736 = vmatprep.subr.mxu0 0.0
        %737 = vmatpush1.msra.mxu0 0.0
        %738 = vmatprep.subr.mxu0 0.0
        %739 = vmatpush1.msra.mxu0 0.0
        %740 = vmatprep.subr.mxu0 0.0
        %741 = vmatpush1.msra.mxu0 0.0
        %742 = vmatprep.subr.mxu0 0.0
        %743 = vmatpush1.msra.mxu0 0.0
        %744 = vmatprep.subr.mxu0 0.0
        %745 = vmatpush1.msra.mxu0 0.0
        %746 = vmatprep.subr.mxu0 0.0
        %747 = vmatpush1.msra.mxu0 0.0
        %748 = vmatprep.subr.mxu0 0.0
        %749 = vmatpush1.msra.mxu0 0.0
        %750 = vmatprep.subr.mxu0 0.0
        %751 = vmatpush1.msra.mxu0 0.0
        %752 = vmatprep.subr.mxu0 0.0
        %753 = vmatpush1.msra.mxu0 0.0
        %754 = vmatprep.subr.mxu0 0.0
        %755 = vmatpush1.msra.mxu0 0.0
        %756 = vmatprep.subr.mxu0 0.0
        %757 = vmatpush1.msra.mxu0 0.0
        %758 = vmatprep.subr.mxu0 0.0
        %759 = vmatpush1.msra.mxu0 0.0
        %760 = vmatprep.subr.mxu0 0.0
        %761 = vmatpush1.msra.mxu0 0.0
        %762 = vmatprep.subr.mxu0 0.0
        %763 = vmatpush1.msra.mxu0 0.0
        %764 = vmatprep.subr.mxu0 0.0
        %765 = vmatpush1.msra.mxu0 0.0
        %766 = vmatprep.subr.mxu0 0.0
        %767 = vmatpush1.msra.mxu0 0.0
        %768 = vmatprep.subr.mxu0 0.0
        %769 = vmatpush1.msra.mxu0 0.0
        %770 = vmatprep.subr.mxu0 0.0
        %771 = vmatpush1.msra.mxu0 0.0
        %772 = vmatprep.subr.mxu0 0.0
        %773 = vmatpush1.msra.mxu0 0.0
        %774 = vmatprep.subr.mxu0 0.0
        %775 = vmatpush1.msra.mxu0 0.0
        %776 = vmatprep.subr.mxu0 0.0
        %777 = vmatpush1.msra.mxu0 0.0
        %778 = vmatprep.subr.mxu0 0.0
        %779 = vmatpush1.msra.mxu0 0.0
        %780 = vmatprep.subr.mxu0 0.0
        %781 = vmatpush1.msra.mxu0 0.0
        %782 = vmatprep.subr.mxu0 0.0
        %783 = vmatpush1.msra.mxu0 0.0
        %784 = vmatprep.subr.mxu0 0.0
        %785 = vmatpush1.msra.mxu0 0.0
        %786 = vmatprep.mubr.f32.mxu0 0.0
        %787 = vmatmul.mubr.f32.gmra.mrb[0].mxu0 %v720
        %v788 = vpop.f32.mrb[0].mxu0
        %v789 = vadd.f32 0.0, %v788
        %v790 = vpop.f32.mrb[0].mxu0
        %791 = vdwg.mxu0
        %v793 = vsel %vm670, %v710, 0
        %795 = vmatprep.subr.mxu0 0.0
        %796 = vmatpush1.msra.mxu0 %v716
        %797 = vmatprep.subr.mxu0 0.0
        %798 = vmatpush1.msra.mxu0 0.0
        %799 = vmatprep.subr.mxu0 0.0
        %800 = vmatpush1.msra.mxu0 0.0
        %801 = vmatprep.subr.mxu0 0.0
        %802 = vmatpush1.msra.mxu0 0.0
        %803 = vmatprep.subr.mxu0 0.0
        %804 = vmatpush1.msra.mxu0 0.0
        %805 = vmatprep.subr.mxu0 0.0
        %806 = vmatpush1.msra.mxu0 0.0
        %807 = vmatprep.subr.mxu0 0.0
        %808 = vmatpush1.msra.mxu0 0.0
        %809 = vmatprep.subr.mxu0 0.0
        %810 = vmatpush1.msra.mxu0 0.0
        %811 = vmatprep.subr.mxu0 0.0
        %812 = vmatpush1.msra.mxu0 0.0
        %813 = vmatprep.subr.mxu0 0.0
        %814 = vmatpush1.msra.mxu0 0.0
        %815 = vmatprep.subr.mxu0 0.0
        %816 = vmatpush1.msra.mxu0 0.0
        %817 = vmatprep.subr.mxu0 0.0
        %818 = vmatpush1.msra.mxu0 0.0
        %819 = vmatprep.subr.mxu0 0.0
        %820 = vmatpush1.msra.mxu0 0.0
        %821 = vmatprep.subr.mxu0 0.0
        %822 = vmatpush1.msra.mxu0 0.0
        %823 = vmatprep.subr.mxu0 0.0
        %824 = vmatpush1.msra.mxu0 0.0
        %825 = vmatprep.subr.mxu0 0.0
        %826 = vmatpush1.msra.mxu0 0.0
        %827 = vmatprep.subr.mxu0 0.0
        %828 = vmatpush1.msra.mxu0 0.0
        %829 = vmatprep.subr.mxu0 0.0
        %830 = vmatpush1.msra.mxu0 0.0
        %831 = vmatprep.subr.mxu0 0.0
        %832 = vmatpush1.msra.mxu0 0.0
        %833 = vmatprep.subr.mxu0 0.0
        %834 = vmatpush1.msra.mxu0 0.0
        %835 = vmatprep.subr.mxu0 0.0
        %836 = vmatpush1.msra.mxu0 0.0
        %837 = vmatprep.subr.mxu0 0.0
        %838 = vmatpush1.msra.mxu0 0.0
        %839 = vmatprep.subr.mxu0 0.0
        %840 = vmatpush1.msra.mxu0 0.0
        %841 = vmatprep.subr.mxu0 0.0
        %842 = vmatpush1.msra.mxu0 0.0
        %843 = vmatprep.subr.mxu0 0.0
        %844 = vmatpush1.msra.mxu0 0.0
        %845 = vmatprep.subr.mxu0 0.0
        %846 = vmatpush1.msra.mxu0 0.0
        %847 = vmatprep.subr.mxu0 0.0
        %848 = vmatpush1.msra.mxu0 0.0
        %849 = vmatprep.subr.mxu0 0.0
        %850 = vmatpush1.msra.mxu0 0.0
        %851 = vmatprep.subr.mxu0 0.0
        %852 = vmatpush1.msra.mxu0 0.0
        %853 = vmatprep.subr.mxu0 0.0
        %854 = vmatpush1.msra.mxu0 0.0
        %855 = vmatprep.subr.mxu0 0.0
        %856 = vmatpush1.msra.mxu0 0.0
        %857 = vmatprep.subr.mxu0 0.0
        %858 = vmatpush1.msra.mxu0 0.0
        %859 = vmatprep.mubr.f32.mxu0 0.0
        %860 = vmatmul.mubr.f32.gmra.mrb[0].mxu0 %v793
        %v861 = vpop.f32.mrb[0].mxu0
        %v862 = vadd.f32 0.0, %v861
        %v863 = vpop.f32.mrb[0].mxu0
        %864 = vdwg.mxu0
        %v866 = vsel %vm670, %v712, 0
        %868 = vmatprep.subr.mxu0 0.0
        %869 = vmatpush1.msra.mxu0 %v717
        %870 = vmatprep.subr.mxu0 0.0
        %871 = vmatpush1.msra.mxu0 0.0
        %872 = vmatprep.subr.mxu0 0.0
        %873 = vmatpush1.msra.mxu0 0.0
        %874 = vmatprep.subr.mxu0 0.0
        %875 = vmatpush1.msra.mxu0 0.0
        %876 = vmatprep.subr.mxu0 0.0
        %877 = vmatpush1.msra.mxu0 0.0
        %878 = vmatprep.subr.mxu0 0.0
        %879 = vmatpush1.msra.mxu0 0.0
        %880 = vmatprep.subr.mxu0 0.0
        %881 = vmatpush1.msra.mxu0 0.0
        %882 = vmatprep.subr.mxu0 0.0
        %883 = vmatpush1.msra.mxu0 0.0
        %884 = vmatprep.subr.mxu0 0.0
        %885 = vmatpush1.msra.mxu0 0.0
        %886 = vmatprep.subr.mxu0 0.0
        %887 = vmatpush1.msra.mxu0 0.0
        %888 = vmatprep.subr.mxu0 0.0
        %889 = vmatpush1.msra.mxu0 0.0
        %890 = vmatprep.subr.mxu0 0.0
        %891 = vmatpush1.msra.mxu0 0.0
        %892 = vmatprep.subr.mxu0 0.0
        %893 = vmatpush1.msra.mxu0 0.0
        %894 = vmatprep.subr.mxu0 0.0
        %895 = vmatpush1.msra.mxu0 0.0
        %896 = vmatprep.subr.mxu0 0.0
        %897 = vmatpush1.msra.mxu0 0.0
        %898 = vmatprep.subr.mxu0 0.0
        %899 = vmatpush1.msra.mxu0 0.0
        %900 = vmatprep.subr.mxu0 0.0
        %901 = vmatpush1.msra.mxu0 0.0
        %902 = vmatprep.subr.mxu0 0.0
        %903 = vmatpush1.msra.mxu0 0.0
        %904 = vmatprep.subr.mxu0 0.0
        %905 = vmatpush1.msra.mxu0 0.0
        %906 = vmatprep.subr.mxu0 0.0
        %907 = vmatpush1.msra.mxu0 0.0
        %908 = vmatprep.subr.mxu0 0.0
        %909 = vmatpush1.msra.mxu0 0.0
        %910 = vmatprep.subr.mxu0 0.0
        %911 = vmatpush1.msra.mxu0 0.0
        %912 = vmatprep.subr.mxu0 0.0
        %913 = vmatpush1.msra.mxu0 0.0
        %914 = vmatprep.subr.mxu0 0.0
        %915 = vmatpush1.msra.mxu0 0.0
        %916 = vmatprep.subr.mxu0 0.0
        %917 = vmatpush1.msra.mxu0 0.0
        %918 = vmatprep.subr.mxu0 0.0
        %919 = vmatpush1.msra.mxu0 0.0
        %920 = vmatprep.subr.mxu0 0.0
        %921 = vmatpush1.msra.mxu0 0.0
        %922 = vmatprep.subr.mxu0 0.0
        %923 = vmatpush1.msra.mxu0 0.0
        %924 = vmatprep.subr.mxu0 0.0
        %925 = vmatpush1.msra.mxu0 0.0
        %926 = vmatprep.subr.mxu0 0.0
        %927 = vmatpush1.msra.mxu0 0.0
        %928 = vmatprep.subr.mxu0 0.0
        %929 = vmatpush1.msra.mxu0 0.0
        %930 = vmatprep.subr.mxu0 0.0
        %931 = vmatpush1.msra.mxu0 0.0
        %932 = vmatprep.mubr.f32.mxu0 0.0
        %933 = vmatmul.mubr.f32.gmra.mrb[0].mxu0 %v866
        %v934 = vpop.f32.mrb[0].mxu0
        %v935 = vadd.f32 0.0, %v934
        %v936 = vpop.f32.mrb[0].mxu0
        %937 = vdwg.mxu0
        %v939 = vsel %vm670, %v714, 0
        %941 = vmatprep.subr.mxu0 0.0
        %942 = vmatpush1.msra.mxu0 %v718
        %943 = vmatprep.subr.mxu0 0.0
        %944 = vmatpush1.msra.mxu0 0.0
        %945 = vmatprep.subr.mxu0 0.0
        %946 = vmatpush1.msra.mxu0 0.0
        %947 = vmatprep.subr.mxu0 0.0
        %948 = vmatpush1.msra.mxu0 0.0
        %949 = vmatprep.subr.mxu0 0.0
        %950 = vmatpush1.msra.mxu0 0.0
        %951 = vmatprep.subr.mxu0 0.0
        %952 = vmatpush1.msra.mxu0 0.0
        %953 = vmatprep.subr.mxu0 0.0
        %954 = vmatpush1.msra.mxu0 0.0
        %955 = vmatprep.subr.mxu0 0.0
        %956 = vmatpush1.msra.mxu0 0.0
        %957 = vmatprep.subr.mxu0 0.0
        %958 = vmatpush1.msra.mxu0 0.0
        %959 = vmatprep.subr.mxu0 0.0
        %960 = vmatpush1.msra.mxu0 0.0
        %961 = vmatprep.subr.mxu0 0.0
        %962 = vmatpush1.msra.mxu0 0.0
        %963 = vmatprep.subr.mxu0 0.0
        %964 = vmatpush1.msra.mxu0 0.0
        %965 = vmatprep.subr.mxu0 0.0
        %966 = vmatpush1.msra.mxu0 0.0
        %967 = vmatprep.subr.mxu0 0.0
        %968 = vmatpush1.msra.mxu0 0.0
        %969 = vmatprep.subr.mxu0 0.0
        %970 = vmatpush1.msra.mxu0 0.0
        %971 = vmatprep.subr.mxu0 0.0
        %972 = vmatpush1.msra.mxu0 0.0
        %973 = vmatprep.subr.mxu0 0.0
        %974 = vmatpush1.msra.mxu0 0.0
        %975 = vmatprep.subr.mxu0 0.0
        %976 = vmatpush1.msra.mxu0 0.0
        %977 = vmatprep.subr.mxu0 0.0
        %978 = vmatpush1.msra.mxu0 0.0
        %979 = vmatprep.subr.mxu0 0.0
        %980 = vmatpush1.msra.mxu0 0.0
        %981 = vmatprep.subr.mxu0 0.0
        %982 = vmatpush1.msra.mxu0 0.0
        %983 = vmatprep.subr.mxu0 0.0
        %984 = vmatpush1.msra.mxu0 0.0
        %985 = vmatprep.subr.mxu0 0.0
        %986 = vmatpush1.msra.mxu0 0.0
        %987 = vmatprep.subr.mxu0 0.0
        %988 = vmatpush1.msra.mxu0 0.0
        %989 = vmatprep.subr.mxu0 0.0
        %990 = vmatpush1.msra.mxu0 0.0
        %991 = vmatprep.subr.mxu0 0.0
        %992 = vmatpush1.msra.mxu0 0.0
        %993 = vmatprep.subr.mxu0 0.0
        %994 = vmatpush1.msra.mxu0 0.0
        %995 = vmatprep.subr.mxu0 0.0
        %996 = vmatpush1.msra.mxu0 0.0
        %997 = vmatprep.subr.mxu0 0.0
        %998 = vmatpush1.msra.mxu0 0.0
        %999 = vmatprep.subr.mxu0 0.0
        %1000 = vmatpush1.msra.mxu0 0.0
        %1001 = vmatprep.subr.mxu0 0.0
        %1002 = vmatpush1.msra.mxu0 0.0
        %1003 = vmatprep.subr.mxu0 0.0
        %1004 = vmatpush1.msra.mxu0 0.0
        %1005 = vmatprep.mubr.f32.mxu0 0.0
        %1006 = vmatmul.mubr.f32.gmra.mrb[0].mxu0 %v939
        %v1007 = vpop.f32.mrb[0].mxu0
        %v1008 = vadd.f32 0.0, %v1007
        %v1009 = vpop.f32.mrb[0].mxu0
        %1010 = vdwg.mxu0
        %1011 = vst.msk [vmem:[%s340] sm:$0xff] %vm361, %v789
        %1012 = vst.msk [vmem:[%s340 + $0x8] sm:$0xff] %vm361, %v862
        %1013 = vst.msk [vmem:[%s340 + $0x10] sm:$0xff] %vm361, %v935
        %1014 = vst.msk [vmem:[%s340 + $0x18] sm:$0xff] %vm361, %v1008
        %1015 = vst.msk [vmem:[%s347] sm:$0xff] %vm670, %v708
        %1016 = vst.msk [vmem:[%s347 + $0x8] sm:$0xff] %vm670, %v710
        %1017 = vst.msk [vmem:[%s347 + $0x10] sm:$0xff] %vm670, %v712
        %1018 = vst.msk [vmem:[%s347 + $0x18] sm:$0xff] %vm670, %v714
        %s1019 = sand.u32 %s147, 1
        %s1020 = scalar_lea.sflag [#allocation6], %s1019
        %s1021 = sand.u32 %s147, 1
        %s1022 = smul.addr %s1021, 32
        %s1023 = scalar_lea.vmem [#allocation10], %s1022
        %s1024 = sand.u32 %s177, 1
        %s1025 = scalar_lea.sflag [#allocation12], %s1024
        %s1026 = sand.u32 %s177, 1
        %s1027 = smul.addr %s1026, 32
        %s1028 = scalar_lea.vmem [#allocation11], %s1027
        // Predicated region
        $region45: #{tpu_custom_call.1} parent=31 // pred_check
          %p1029 = pneg %p157
        $region46: #{tpu_custom_call.1} parent=31 // pred_check_branch
          %1031 = sbr.rel (%p1029) target = $region48
        $region47: #{tpu_custom_call.1} parent=31 // pred_region
          %s1032 = smul.u32 4, %s36
          %s1034 = ssub.s32 512, 512
          %1035 = vsyncadd %s1020, %s1034
          %s1036 = sadd.s32 %s37, %s1032
          %s1037 = smul.addr %s35, 4
          %s1038 = sadd.s32 %s1036, %s1037
          %s1039 = smul.addr %s1038, 128
          %s1040 = scalar_lea.hbm %s4, %s1039
          %s1041 = sshll.u32 %s1023, 4
          %s1042 = int_to_ptr.vmem [resolvable:$true] %s1041
          %1047 = dma.vmem_to_hbm [thread:$0]  %s1042, 512, %s1040, %s1020, 128, 128, 8
        $region48: #{tpu_custom_call.1} parent=31 // pred_fallthru
          _
        // Predicated region
        $region49: #{tpu_custom_call.1} parent=31 // pred_check
          %p1048 = pneg %p187
        $region50: #{tpu_custom_call.1} parent=31 // pred_check_branch
          %1050 = sbr.rel (%p1048) target = $region52
        $region51: #{tpu_custom_call.1} parent=31 // pred_region
          %s1051 = smul.u32 4, %s36
          %s1053 = ssub.s32 512, 512
          %1054 = vsyncadd %s1025, %s1053
          %s1055 = sadd.s32 %s37, %s1051
          %s1056 = smul.addr %s35, 4
          %s1057 = sadd.s32 %s1055, %s1056
          %s1058 = smul.addr %s1057, 128
          %s1059 = scalar_lea.hbm %s5, %s1058
          %s1060 = sshll.u32 %s1028, 4
          %s1061 = int_to_ptr.vmem [resolvable:$true] %s1060
          %1066 = dma.vmem_to_hbm [thread:$0]  %s1061, 512, %s1059, %s1025, 128, 128, 8
        $region52: #{tpu_custom_call.1} parent=31 // pred_fallthru
          _
      $region32: #{tpu_custom_call.1} parent=5 // pred_fallthru
        _
      %p1067 = scmp.le.s32.totalorder 2, %s25
      // Predicated region
      $region53: #{tpu_custom_call.1} parent=5 // pred_check
        %p1068 = pneg %p1067
      $region54: #{tpu_custom_call.1} parent=5 // pred_check_branch
        %1070 = sbr.rel (%p1068) target = $region56
      $region55: #{tpu_custom_call.1} parent=5 // pred_region
        %s1071 = ssub.s32 %s25, 2
        // Predicated region
        $region57: #{tpu_custom_call.1} parent=55 // pred_check
          %p1072 = pneg %p163
        $region58: #{tpu_custom_call.1} parent=55 // pred_check_branch
          %1074 = sbr.rel (%p1072) target = $region60
        $region59: #{tpu_custom_call.1} parent=55 // pred_region
          %s1075 = sand.u32 %s148, 1
          %s1076 = scalar_lea.sflag [#allocation6], %s1075
          %s1077 = sand.u32 %s148, 1
          %s1078 = smul.addr %s1077, 32
          %s1079 = scalar_lea.vmem [#allocation10], %s1078
          %1080 = dma.done %s1076, 512
        $region60: #{tpu_custom_call.1} parent=55 // pred_fallthru
          _
        // Predicated region
        $region61: #{tpu_custom_call.1} parent=55 // pred_check
          %p1081 = pneg %p193
        $region62: #{tpu_custom_call.1} parent=55 // pred_check_branch
          %1083 = sbr.rel (%p1081) target = $region64
        $region63: #{tpu_custom_call.1} parent=55 // pred_region
          %s1084 = sand.u32 %s178, 1
          %s1085 = scalar_lea.sflag [#allocation12], %s1084
          %s1086 = sand.u32 %s178, 1
          %s1087 = smul.addr %s1086, 32
          %s1088 = scalar_lea.vmem [#allocation11], %s1087
          %1089 = dma.done %s1085, 512
        $region64: #{tpu_custom_call.1} parent=55 // pred_fallthru
          _
      $region56: #{tpu_custom_call.1} parent=5 // pred_fallthru
        _
    $region6: #{tpu_custom_call.1} parent=1 // loop_footer
      %s29 = sadd.s32 1, %s25
    $region7: #{tpu_custom_call.1} parent=1 // loop_footer_branch
      %24 = sbr.rel target = $region3
    $region8: #{tpu_custom_call.1} parent=1 // loop_exit
      _
    %1090 = vsyncpa [#allocation5], 1
    %s1091 = scalar_lea.sflag [#allocation5], 1
    %1092 = vsyncpa %s1091, 1
    %1093 = vsyncpa [#allocation8], 1
    %s1094 = scalar_lea.sflag [#allocation8], 1
    %1095 = vsyncpa %s1094, 1
    %1096 = vsyncpa [#allocation6], 1
    %s1097 = scalar_lea.sflag [#allocation6], 1
    %1098 = vsyncpa %s1097, 1
    %1099 = vsyncpa [#allocation12], 1
    %s1100 = scalar_lea.sflag [#allocation12], 1
    %1101 = vsyncpa %s1100, 1

</llo_original>
